<compile_context>
chip_gen: v7x
topology: tpu7x:2x2x1
jax: 0.10.0
libtpu: 0.0.40
codegen_flags: <defaults>
</compile_context>

<pallas_src>
import functools

import jax
import jax.numpy as jnp
from jax.experimental import pallas as pl
from jax.experimental.pallas import tpu as pltpu


# ----------------------------------------------------------------------------
# Kernel
# ----------------------------------------------------------------------------
def _make_deltam_kernel(C, shifts1, shifts2):
  """Fused DeltaM kernel, one batch element per grid step.

  Refs (in order):
    x1_ref  : [1, C, L] f32   residual input, H*W flattened onto lanes
    x2_ref  : [1, C, L] f32   conv1 input, same layout
    m1_ref  : [9C, L]   bf16  per-tap validity masks, conv1 (dil 2, pad 2)
    m2_ref  : [9C, L]   bf16  per-tap validity masks, conv2 (dil 1, pad 1)
    w1_ref  : [C, 9C]   bf16  conv1 weights * BN1 scale, cols = (kh, kw, cin)
    b1_ref  : [C, 1]    f32   folded BN1 shift
    w2_ref  : [C, 9C]   bf16  conv2 weights * BN2 scale
    b2_ref  : [C, 1]    f32   folded BN2 shift
    out_ref : [1, C, L] f32
    col_ref : [9C, L]   bf16  VMEM im2col scratch (reused by both convs)

  Mask invariant: tap t of output lane m reads source lane (m + off_t) mod L;
  its mask is 1 only when that source is a genuine in-bounds pixel, so any
  lane where the lane-roll wrapped (or hit a padding lane) contributes 0.
  """

  def kernel(x1_ref, x2_ref, m1_ref, m2_ref, w1_ref, b1_ref,
             w2_ref, b2_ref, out_ref, col_ref):
    # -------- conv1: 3x3, dilation 2, pad 2 (padding via per-tap masks) ----
    x2b = x2_ref[0].astype(jnp.bfloat16)                 # single cast per conv
    for t, sh in enumerate(shifts1):                     # static unroll, 9 taps
      piece = x2b if sh == 0 else pltpu.roll(x2b, sh, 1)  # bf16 lane rotate
      col_ref[t * C:(t + 1) * C, :] = piece * m1_ref[t * C:(t + 1) * C, :]
    acc1 = jnp.dot(w1_ref[...], col_ref[...],            # [C,9C] @ [9C,L]
                   preferred_element_type=jnp.float32)   # -> [C, L] f32

    # BN1 (scale already folded into w1) + residual add + ReLU, all f32.
    y = jnp.maximum(acc1 + b1_ref[...] + x1_ref[0], 0.0)

    # -------- conv2: 3x3, dilation 1, pad 1 --------------------------------
    yb = y.astype(jnp.bfloat16)
    for t, sh in enumerate(shifts2):
      piece = yb if sh == 0 else pltpu.roll(yb, sh, 1)
      col_ref[t * C:(t + 1) * C, :] = piece * m2_ref[t * C:(t + 1) * C, :]
    acc2 = jnp.dot(w2_ref[...], col_ref[...],
                   preferred_element_type=jnp.float32)

    # BN2 (scale folded) + ReLU, lane-dense store.
    out_ref[0] = jnp.maximum(acc2 + b2_ref[...], 0.0)

  return kernel


# ----------------------------------------------------------------------------
# Wrapper-side parameter / layout plumbing (pure trace-time, no compute hoist)
# ----------------------------------------------------------------------------
def _fold_bn(gamma, beta, mean, var, eps):
  scale = gamma / jnp.sqrt(var + eps)
  shift = beta - mean * scale
  return scale.astype(jnp.float32), shift.reshape(-1, 1).astype(jnp.float32)


def _pack_weight(w_oihw, scale):
  # Fold the BN per-channel scale into the weights (f32), then pack
  # [Cout, Cin, 3, 3] -> [Cout, 9*Cin] bf16; column = (kh*3 + kw)*Cin + cin.
  co, ci, kh, kw = w_oihw.shape
  w = w_oihw * scale.reshape(-1, 1, 1, 1)
  w = jnp.transpose(w, (0, 2, 3, 1)).reshape(co, kh * kw * ci)
  return w.astype(jnp.bfloat16)


def _flatten_lanes(x_nchw, L):
  # NCHW -> [B, C, L]: flatten HxW onto lanes (free reshape of a contiguous
  # array); zero-pad only if H*W is not already a multiple of 128.
  B, C, H, W = x_nchw.shape
  xf = x_nchw.reshape(B, C, H * W)
  if L > H * W:
    xf = jnp.pad(xf, ((0, 0), (0, 0), (0, L - H * W)))
  return xf


def _tap_masks(H, W, L, dil, C):
  # [9C, L] bf16 validity masks, tap-major rows matching the im2col scratch.
  m = jnp.arange(L)
  hh, ww = m // W, m % W
  in_frame = m < H * W
  rows = []
  for kh in range(3):
    for kw in range(3):
      dh, dw = dil * (kh - 1), dil * (kw - 1)
      ok = (in_frame & (hh + dh >= 0) & (hh + dh < H)
            & (ww + dw >= 0) & (ww + dw < W))
      rows.append(ok)
  masks = jnp.stack(rows, 0).astype(jnp.bfloat16)        # [9, L]
  return jnp.repeat(masks, C, axis=0)                    # [9C, L]


@functools.partial(jax.jit, static_argnames=("roll_like_jnp",))
def deltam_forward(x1, x2, params, *, roll_like_jnp=True, eps=1e-5):
  """x1, x2: NCHW float32 [B, C, H, W] (PyTorch-native layout)."""
  B, C, H, W = x1.shape
  L = ((H * W + 127) // 128) * 128       # lane-dense flattened length
  KC = 9 * C

  # Tap offsets in the flattened (h*W + w) frame; with jnp.roll-like semantics
  # result[m] = src[m - shift], and we need src[(m + off) mod L].
  def _shifts(dil):
    offs = [dil * (kh - 1) * W + dil * (kw - 1)
            for kh in range(3) for kw in range(3)]
    return tuple(((-o) % L if roll_like_jnp else o % L) for o in offs)

  shifts1, shifts2 = _shifts(2), _shifts(1)

  # Layout / parameter plumbing (no padded-frame HBM round trips).
  x1_cl = _flatten_lanes(x1, L)
  x2_cl = _flatten_lanes(x2, L)
  mask1 = _tap_masks(H, W, L, 2, C)
  mask2 = _tap_masks(H, W, L, 1, C)

  s1, b1 = _fold_bn(params["g1"], params["be1"], params["m1"], params["v1"], eps)
  s2, b2 = _fold_bn(params["g2"], params["be2"], params["m2"], params["v2"], eps)
  w1t = _pack_weight(params["w1"], s1)     # BN1 scale folded into the weights
  w2t = _pack_weight(params["w2"], s2)

  kernel = _make_deltam_kernel(C, shifts1, shifts2)

  grid_spec = pltpu.PrefetchScalarGridSpec(
      num_scalar_prefetch=0,
      grid=(B,),
      in_specs=[
          pl.BlockSpec((1, C, L), lambda b: (b, 0, 0)),   # x1
          pl.BlockSpec((1, C, L), lambda b: (b, 0, 0)),   # x2
          pl.BlockSpec((KC, L), lambda b: (0, 0)),        # conv1 tap masks
          pl.BlockSpec((KC, L), lambda b: (0, 0)),        # conv2 tap masks
          pl.BlockSpec((C, KC), lambda b: (0, 0)),        # w1 (bf16, BN folded)
          pl.BlockSpec((C, 1), lambda b: (0, 0)),         # b1 shift
          pl.BlockSpec((C, KC), lambda b: (0, 0)),        # w2 (bf16, BN folded)
          pl.BlockSpec((C, 1), lambda b: (0, 0)),         # b2 shift
      ],
      out_specs=pl.BlockSpec((1, C, L), lambda b: (b, 0, 0)),
      scratch_shapes=[pltpu.VMEM((KC, L), jnp.bfloat16)],  # im2col scratch
  )

  out_cl = pl.pallas_call(
      kernel,
      out_shape=jax.ShapeDtypeStruct((B, C, L), jnp.float32),
      grid_spec=grid_spec,
      # Footprint here is ~1 MiB so the default scoped-VMEM limit is plenty;
      # raise vmem_limit_bytes (~48 MiB v7x, ~100 MiB v6e/v5e) only once the
      # row-tile axis for large frames exists (see TODO above).
      compiler_params=pltpu.CompilerParams(
          dimension_semantics=("parallel",)),
  )(x1_cl, x2_cl, mask1, mask2, w1t, b1, w2t, b2)

  # Back to NCHW.  When H*W is a multiple of 128 (demo size) this is a free
  # reshape; otherwise drop the (garbage) padding lanes first.
  if L > H * W:
    out_cl = out_cl[:, :, :H * W]
  return out_cl.reshape(B, C, H, W)


# ----------------------------------------------------------------------------
# Tiny probe: pin the lane-rotate direction convention of pltpu.roll on the
# actual backend (the end-to-end check below verifies the chosen convention).
# ----------------------------------------------------------------------------
def _probe_roll_kernel(x_ref, o_ref):
  o_ref[...] = pltpu.roll(x_ref[...], 1, 1)


def _roll_is_jnp_like():
  n = 256
  x = jnp.broadcast_to(jax.lax.iota(jnp.float32, n)[None, :], (8, n))
  y = pl.pallas_call(
      _probe_roll_kernel,
      out_shape=jax.ShapeDtypeStruct((8, n), jnp.float32))(x)
  # jnp.roll(x, 1, axis=1)[0, 0] == x[0, -1] == n - 1
  return bool(y[0, 0] == float(n - 1))


# ----------------------------------------------------------------------------
# Plain-JAX f32 reference mirroring the PyTorch forward (NCHW).
# ----------------------------------------------------------------------------
def _reference(x1, x2, p, eps=1e-5):
  def conv(x, w, dil, pad):
    return jax.lax.conv_general_dilated(
        x, w, window_strides=(1, 1), padding=[(pad, pad), (pad, pad)],
        rhs_dilation=(dil, dil),
        dimension_numbers=("NCHW", "OIHW", "NCHW"))

  def bn(x, g, be, m, v):
    c = x.shape[1]
    rs = lambda a: a.reshape(1, c, 1, 1)
    return (x - rs(m)) / jnp.sqrt(rs(v) + eps) * rs(g) + rs(be)

  y = jax.nn.relu(x1 + bn(conv(x2, p["w1"], 2, 2),
                          p["g1"], p["be1"], p["m1"], p["v1"]))
  z = jax.nn.relu(bn(conv(y, p["w2"], 1, 1),
                     p["g2"], p["be2"], p["m2"], p["v2"]))
  return z


if __name__ == "__main__":
  B, C, H, W = 2, 32, 16, 16      # mid_channels=32, small synthetic config
  key = jax.random.PRNGKey(0)
  ks = jax.random.split(key, 12)

  x1 = jax.random.normal(ks[0], (B, C, H, W), jnp.float32)
  x2 = jax.random.normal(ks[1], (B, C, H, W), jnp.float32)

  params = dict(
      # Conv weights (OIHW, bias=False because BN follows).
      w1=0.05 * jax.random.normal(ks[2], (C, C, 3, 3), jnp.float32),
      w2=0.05 * jax.random.normal(ks[3], (C, C, 3, 3), jnp.float32),
      # Eval-mode BN affine params + running stats (deterministic synthetic).
      g1=1.0 + 0.1 * jax.random.normal(ks[4], (C,), jnp.float32),
      be1=0.1 * jax.random.normal(ks[5], (C,), jnp.float32),
      m1=0.1 * jax.random.normal(ks[6], (C,), jnp.float32),
      v1=1.0 + 0.1 * jax.random.uniform(ks[7], (C,), jnp.float32),
      g2=1.0 + 0.1 * jax.random.normal(ks[8], (C,), jnp.float32),
      be2=0.1 * jax.random.normal(ks[9], (C,), jnp.float32),
      m2=0.1 * jax.random.normal(ks[10], (C,), jnp.float32),
      v2=1.0 + 0.1 * jax.random.uniform(ks[11], (C,), jnp.float32),
  )

  out = deltam_forward(x1, x2, params, roll_like_jnp=_roll_is_jnp_like())
  out = jax.block_until_ready(out)

  ref = jax.block_until_ready(_reference(x1, x2, params))

  assert out.shape == (B, C, H, W)
  max_err = float(jnp.max(jnp.abs(out - ref)))
  mean_err = float(jnp.mean(jnp.abs(out - ref)))
  # The kernel runs the convs with bf16 MXU operands (f32 accumulation); vs.
  # the pure-f32 reference the expected max error at these magnitudes is
  # ~1e-2, so the tolerances reflect bf16 operand precision, not a bug.
  assert mean_err < 1e-2, mean_err
  assert jnp.allclose(out, ref, atol=5e-2, rtol=5e-2), (max_err, mean_err)
  print("KERNEL_OK")
</pallas_src>

<mosaic_0001>
module attributes {stable_mosaic.version = 11 : i64} {
  func.func @_probe_roll_kernel(%arg0: memref<8x256xf32, #tpu.memory_space<vmem>>, %arg1: memref<8x256xf32, #tpu.memory_space<vmem>>) attributes {dimension_semantics = [], scalar_prefetch = 0 : i64, scratch_operands = 0 : i64, tpu.core_type = #tpu.core_type<tc>} {
    %c0 = arith.constant 0 : index
    %c0_0 = arith.constant 0 : index
    %0 = vector.load %arg0[%c0, %c0_0] : memref<8x256xf32, #tpu.memory_space<vmem>>, vector<8x256xf32>
    %c1_i32 = arith.constant 1 : i32
    %1 = tpu.dynamic_rotate %0 by %c1_i32 dim 1 : vector<8x256xf32>, i32 -> vector<8x256xf32>
    %c0_1 = arith.constant 0 : index
    %c0_2 = arith.constant 0 : index
    %2 = vector.load %arg1[%c0_1, %c0_2] : memref<8x256xf32, #tpu.memory_space<vmem>>, vector<8x256xf32>
    tpu.vector_store %arg1[%c0_1, %c0_2], %1 {strides = array<i32>} : memref<8x256xf32, #tpu.memory_space<vmem>>, vector<8x256xf32>,
    return
  }
}

</mosaic_0001>

<llo_original>
// kernel: tpu_custom_call.1
$region0: #{tpu_custom_call.1}
  #allocation0 [shape = 'u32[]', space=smem, size = 0x4, offset = 0x4, fixed_abs, tag = 'smem constant byte address 0x4 - core index']
  #allocation1 [shape = 'u32[144,128]{1,0:T(1,128)}', space=vmem, size = 0x12000, scoped, tag = 'internal scratch']
  %s0 = inlined_call_operand.hbm [shape: f32[8,256], index: 0, kind: input, shape index: {}]
  %s1 = inlined_call_operand.hbm [shape: f32[8,256], index: 1, kind: output, shape index: {}]
  %s2 = sld [smem:[#allocation0]]
  $region18: #{tpu_custom_call.1} parent=0
    _
  %s4 = ssub.s32 1, %s2
  %s5 = scalar_select 0, %s4, %s2
  $region1: #{tpu_custom_call.1} parent=0
    #allocation2 [shape = 'u8[8192]{0}', space=vmem, size = 0x2000, scoped, tag = 'input window, operand 0, single buffered']
    #allocation3 [shape = 's32[1]{0}', space=sflag, size = 0x4, scoped, tag = 'scoped memory for tpu_custom_call.1']
    #allocation4 [shape = 's32[1]{0}', space=sflag, size = 0x4, scoped, tag = 'scoped memory for tpu_custom_call.1']
    #allocation5 [shape = 'u8[8192]{0}', space=vmem, size = 0x2000, scoped, tag = 'output window, operand 0, single buffered']
    %6 = vsyncpa [#allocation3], 0
    %7 = vsyncpa [#allocation4], 0
    // Predicated region
    $region2: #{tpu_custom_call.1} parent=1 // pred_check
      _
    $region3: #{tpu_custom_call.1} parent=1 // pred_check_branch
      %9 = sbr.rel (0) target = $region5
    $region4: #{tpu_custom_call.1} parent=1 // pred_region
      %s11 = ssub.s32 256, 256
      %12 = vsyncadd [#allocation3], %s11
      %s14 = sshll.u32 [#allocation2], 4
      %s15 = int_to_ptr.vmem [resolvable:$true] %s14
      %17 = dma.hbm_to_vmem [thread:$0]  %s0, 256, %s15, [#allocation3]
    $region5: #{tpu_custom_call.1} parent=1 // pred_fallthru
      _
    // Predicated region
    $region6: #{tpu_custom_call.1} parent=1 // pred_check
      _
    $region7: #{tpu_custom_call.1} parent=1 // pred_check_branch
      %19 = sbr.rel (0) target = $region9
    $region8: #{tpu_custom_call.1} parent=1 // pred_region
      %20 = dma.done [#allocation3], 256
    $region9: #{tpu_custom_call.1} parent=1 // pred_fallthru
      _
    %v21 = vld [vmem:[#allocation2] sm:$0xff]
    %v22 = vld [vmem:[#allocation2 + $0x8] sm:$0xff]
    %23 = vrot.lane.b32.xlu0 %v21, 1
    %v24 = vpop.permute.xlu0 %23
    %25 = vrot.lane.b32.xlu0 %v22, 1
    %v26 = vpop.permute.xlu0 %25
    %v27 = vlaneseq
    %v28 = vand.u32 %v27, 127
    %vm29 = vcmp.lt.s32.totalorder %v28, 1
    %v30 = vsel %vm29, %v24, %v26
    %v31 = vsel %vm29, %v26, %v24
    %32 = vst [vmem:[#allocation5] sm:$0xff] %v31
    %33 = vst [vmem:[#allocation5 + $0x8] sm:$0xff] %v30
    // Predicated region
    $region10: #{tpu_custom_call.1} parent=1 // pred_check
      _
    $region11: #{tpu_custom_call.1} parent=1 // pred_check_branch
      %35 = sbr.rel (0) target = $region13
    $region12: #{tpu_custom_call.1} parent=1 // pred_region
      %s37 = ssub.s32 256, 256
      %38 = vsyncadd [#allocation4], %s37
      %s40 = sshll.u32 [#allocation5], 4
      %s41 = int_to_ptr.vmem [resolvable:$true] %s40
      %43 = dma.vmem_to_hbm [thread:$0]  %s41, 256, %s1, [#allocation4]
    $region13: #{tpu_custom_call.1} parent=1 // pred_fallthru
      _
    // Predicated region
    $region14: #{tpu_custom_call.1} parent=1 // pred_check
      _
    $region15: #{tpu_custom_call.1} parent=1 // pred_check_branch
      %45 = sbr.rel (0) target = $region17
    $region16: #{tpu_custom_call.1} parent=1 // pred_region
      %46 = dma.done [#allocation4], 256
    $region17: #{tpu_custom_call.1} parent=1 // pred_fallthru
      _
    %47 = vsyncpa [#allocation3], 1
    %48 = vsyncpa [#allocation4], 1

</llo_original>
